<compile_context>
chip_gen: v7x
topology: tpu7x:2x2x1
jax: 0.10.0
libtpu: 0.0.40
codegen_flags: <defaults>
</compile_context>

<pallas_src>
import jax
import jax.numpy as jnp
from jax import lax
from jax.experimental import pallas as pl
from jax.experimental.pallas import tpu as pltpu


def _logreg_kernel(x_ref, w_ref, b_ref, o_ref):
    x = x_ref[...]          # [TB, n_in]    -- current batch tile (batch on sublanes)
    w = w_ref[...]          # [n_out, n_in] -- torch layout, VMEM-resident
    b = b_ref[...]          # [n_out, 1]    -- VMEM-resident
    # Lane-dense logits on the MXU: contract feature dims -> [n_out, TB], f32 acc.
    logits = lax.dot_general(
        w, x,
        dimension_numbers=(((1,), (1,)), ((), ())),
        preferred_element_type=jnp.float32,
    ) + b
    # Bias + sigmoid in f32 on VPU/EUP (safe on v5e: no bf16 VPU/EUP path);
    # cast only at the store.
    o_ref[...] = jax.nn.sigmoid(logits).astype(o_ref.dtype)


def logistic_regression(x, weight, bias, *, block_batch=None):
    """x: [B, n_in], weight: [n_out, n_in] (torch layout), bias: [n_out].

    Returns sigmoid(x @ weight.T + bias) with shape [B, n_out].
    """
    B, n_in = x.shape
    n_out = weight.shape[0]

    # Batch tile: as large as reasonable (big tiles amortize the ~0.35us/step
    # grid overhead on this HBM-bound kernel). When tiling (tb != B) the tile
    # must be a multiple of 128 because the batch sits on the output lane axis.
    if block_batch is None:
        block_batch = 8192
    if B <= block_batch or B <= 128:
        tb = B
    else:
        tb = max(128, (min(block_batch, B) // 128) * 128)

    b2d = bias.reshape(n_out, 1)   # broadcasts along lanes of the [n_out, TB] logits

    # Scoped-VMEM budget: double-buffered x + out tiles plus the resident
    # weight/bias, with 2x headroom, clamped to [32 MiB, 48 MiB]. 32 MiB floor
    # lifts v5e's 16 MiB default; 48 MiB cap leaves headroom under v7x's 64 MiB.
    itemsize = jnp.dtype(x.dtype).itemsize
    x_tile_bytes = tb * n_in * itemsize
    o_tile_bytes = n_out * tb * itemsize
    resident_bytes = weight.size * weight.dtype.itemsize + b2d.size * b2d.dtype.itemsize
    vmem_needed = 2 * (x_tile_bytes + o_tile_bytes) + resident_bytes
    vmem_limit = int(min(max(2 * vmem_needed, 32 * 1024 * 1024), 48 * 1024 * 1024))

    grid = (pl.cdiv(B, tb),)
    out_t = pl.pallas_call(
        _logreg_kernel,
        out_shape=jax.ShapeDtypeStruct((n_out, B), x.dtype),
        grid_spec=pl.GridSpec(
            grid=grid,
            in_specs=[
                # x: tiled along batch (sublanes), full feature dim on lanes.
                pl.BlockSpec((tb, n_in), lambda i: (i, 0)),
                # weight: same block every grid step -> stays resident in VMEM.
                pl.BlockSpec((n_out, n_in), lambda i: (0, 0)),
                # bias: resident.
                pl.BlockSpec((n_out, 1), lambda i: (0, 0)),
            ],
            # Lane-dense output: batch tile on the lane axis.
            out_specs=pl.BlockSpec((n_out, tb), lambda i: (0, i)),
        ),
        compiler_params=pltpu.CompilerParams(
            # Batch tiles are independent -> shard across TensorCores (v7x megacore).
            dimension_semantics=("parallel",),
            vmem_limit_bytes=vmem_limit,
        ),
    )(x, weight, b2d)

    # Tiny layout plumbing back to the module's [B, n_out] output layout.
    return out_t.T


if __name__ == "__main__":
    # Shapes consistent with the module: n_inputs=32, n_outputs=16.
    # batch=512 with block_batch=128 exercises a multi-step (grid=(4,)) pipeline
    # with the lane-dense output layout and the weight held resident in VMEM.
    batch, n_inputs, n_outputs = 512, 32, 16

    key = jax.random.PRNGKey(0)
    kx, kw, kb = jax.random.split(key, 3)

    x = jax.random.normal(kx, (batch, n_inputs), dtype=jnp.float32)
    # Deterministic init mimicking nn.Linear's uniform(-1/sqrt(fan_in), 1/sqrt(fan_in)).
    bound = 1.0 / jnp.sqrt(jnp.float32(n_inputs))
    weight = jax.random.uniform(kw, (n_outputs, n_inputs), jnp.float32, -bound, bound)
    bias = jax.random.uniform(kb, (n_outputs,), jnp.float32, -bound, bound)

    y = logistic_regression(x, weight, bias, block_batch=128)
    jax.block_until_ready(y)

    # Reference check in plain JAX: sigmoid(x @ W.T + b) == torch.sigmoid(Linear(x)).
    y_ref = jax.nn.sigmoid(x @ weight.T + bias)
    assert y.shape == (batch, n_outputs)
    assert jnp.allclose(y, y_ref, atol=1e-5, rtol=1e-5)

    # Also exercise the default (single big tile) path.
    y2 = logistic_regression(x, weight, bias)
    jax.block_until_ready(y2)
    assert jnp.allclose(y2, y_ref, atol=1e-5, rtol=1e-5)

    print("KERNEL_OK")
</pallas_src>

<mosaic_0001>
module attributes {stable_mosaic.version = 11 : i64} {
  func.func @_logreg_kernel(%arg0: i32, %arg1: memref<128x32xf32, #tpu.memory_space<vmem>>, %arg2: memref<16x32xf32, #tpu.memory_space<vmem>>, %arg3: memref<16x1xf32, #tpu.memory_space<vmem>>, %arg4: memref<16x128xf32, #tpu.memory_space<vmem>>) attributes {dimension_semantics = [#tpu.dimension_semantics<parallel>], iteration_bounds = array<i64: 4>, scalar_prefetch = 0 : i64, scratch_operands = 0 : i64, tpu.core_type = #tpu.core_type<tc>, window_params = [{transform_indices = @transform_0, window_bounds = array<i64: 128, 32>}, {pipeline_mode = #tpu.pipeline_mode<synchronous>, transform_indices = @transform_1, window_bounds = array<i64: 16, 32>}, {pipeline_mode = #tpu.pipeline_mode<synchronous>, transform_indices = @transform_2, window_bounds = array<i64: 16, 1>}, {transform_indices = @transform_3, window_bounds = array<i64: 16, 128>}]} {
    %c0 = arith.constant 0 : index
    %c0_0 = arith.constant 0 : index
    %0 = vector.load %arg1[%c0, %c0_0] : memref<128x32xf32, #tpu.memory_space<vmem>>, vector<128x32xf32>
    %c0_1 = arith.constant 0 : index
    %c0_2 = arith.constant 0 : index
    %1 = vector.load %arg2[%c0_1, %c0_2] : memref<16x32xf32, #tpu.memory_space<vmem>>, vector<16x32xf32>
    %c0_3 = arith.constant 0 : index
    %c0_4 = arith.constant 0 : index
    %2 = vector.load %arg3[%c0_3, %c0_4] : memref<16x1xf32, #tpu.memory_space<vmem>>, vector<16x1xf32>
    %cst = arith.constant dense<0.000000e+00> : vector<16x128xf32>
    %3 = tpu.matmul %1, %0, %cst {dimension_numbers = #tpu.dot_dimension_numbers<[1], [1], [0], [0], [0, 0, 1, 0], [], []>} : vector<16x32xf32>, vector<128x32xf32>, vector<16x128xf32> -> vector<16x128xf32>
    %4 = vector.broadcast %2 : vector<16x1xf32> to vector<16x128xf32>
    %5 = arith.addf %3, %4 : vector<16x128xf32>
    %6 = arith.negf %5 : vector<16x128xf32>
    %7 = math.exp %6 : vector<16x128xf32>
    %cst_5 = arith.constant 1.000000e+00 : f32
    %8 = vector.broadcast %cst_5 : f32 to vector<16x128xf32>
    %9 = arith.addf %8, %7 : vector<16x128xf32>
    %10 = arith.divf %8, %9 : vector<16x128xf32>
    %c0_6 = arith.constant 0 : index
    %c0_7 = arith.constant 0 : index
    %11 = vector.load %arg4[%c0_6, %c0_7] : memref<16x128xf32, #tpu.memory_space<vmem>>, vector<16x128xf32>
    tpu.vector_store %arg4[%c0_6, %c0_7], %10 {strides = array<i32>} : memref<16x128xf32, #tpu.memory_space<vmem>>, vector<16x128xf32>,
    return
  }
  func.func @transform_0(%arg0: i32) -> (i32, i32) {
    %c0_i32 = arith.constant 0 : i32
    %c0_i32_0 = arith.constant 0 : i32
    return %arg0, %c0_i32 : i32, i32
  }
  func.func @transform_1(%arg0: i32) -> (i32, i32) {
    %c0_i32 = arith.constant 0 : i32
    %c0_i32_0 = arith.constant 0 : i32
    %c0_i32_1 = arith.constant 0 : i32
    return %c0_i32, %c0_i32_0 : i32, i32
  }
  func.func @transform_2(%arg0: i32) -> (i32, i32) {
    %c0_i32 = arith.constant 0 : i32
    %c0_i32_0 = arith.constant 0 : i32
    %c0_i32_1 = arith.constant 0 : i32
    return %c0_i32, %c0_i32_0 : i32, i32
  }
  func.func @transform_3(%arg0: i32) -> (i32, i32) {
    %c0_i32 = arith.constant 0 : i32
    %c0_i32_0 = arith.constant 0 : i32
    return %c0_i32, %arg0 : i32, i32
  }
}

</mosaic_0001>

<llo_original>
// kernel: tpu_custom_call.1
$region0: #{tpu_custom_call.1}
  #allocation0 [shape = 'u32[]', space=smem, size = 0x4, offset = 0x4, fixed_abs, tag = 'smem constant byte address 0x4 - core index']
  #allocation1 [shape = 'u32[144,128]{1,0:T(1,128)}', space=vmem, size = 0x12000, scoped, tag = 'internal scratch']
  %s0 = inlined_call_operand.vmem [shape: f32[512,32], index: 0, kind: input, shape index: {}]
  %s1 = inlined_call_operand.vmem [shape: f32[16,32], index: 1, kind: input, shape index: {}]
  %s2 = inlined_call_operand.vmem [shape: f32[16,1], index: 2, kind: input, shape index: {}]
  %s3 = inlined_call_operand.hbm [shape: f32[16,512], index: 3, kind: output, shape index: {}]
  %s4 = sld [smem:[#allocation0]]
  $region45: #{tpu_custom_call.1} parent=0
    _
  %s6 = ssub.s32 1, %s4
  %s7 = scalar_select 0, %s6, %s4
  $region1: #{tpu_custom_call.1} parent=0
    #allocation2 [shape = 'u8[16384]{0}', space=vmem, size = 0x4000, scoped, tag = 'output window, operand 0']
    #allocation3 [shape = 's32[2]{0}', space=sflag, size = 0x8, scoped, tag = 'scoped memory for tpu_custom_call.1']
    %8 = vsyncpa [#allocation3], 0
    %s9 = scalar_lea.sflag [#allocation3], 1
    %10 = vsyncpa %s9, 0
    loop: start=0, step=1, limit=6
    $region2: #{tpu_custom_call.1} parent=1 // loop_pre_header
      _
    $region3: #{tpu_custom_call.1} parent=1 // loop_header
      %s12 = sphi 0, %s16
      %p13 = scmp.ge.s32.totalorder %s12, 6
      %s22 = sphi 0, %s24
      %s25 = sphi 0, %s22
      %s26 = sphi 0, %s25
      %s42 = sphi 0, %s26
      %s46 = sphi 0, %s46
      %s48 = sphi 0, %s46
      %s49 = sphi 0, %s48
      %s63 = sphi 0, %s49
      %s67 = sphi 0, %s67
      %s69 = sphi 0, %s67
      %s70 = sphi 0, %s69
      %s84 = sphi 0, %s70
      %s90 = sphi 0, %s92
      %s93 = sphi 0, %s90
      %s94 = sphi 0, %s93
      %s110 = sphi 0, %s94
    $region4: #{tpu_custom_call.1} parent=1 // loop_header_branch
      %15 = sbr.rel (%p13) target = $region8
    $region5: #{tpu_custom_call.1} parent=1 // loop_body
      %s17 = ssub.s32 %s12, 1
      %s18 = ssub.s32 %s12, 2
      %s19 = sadd.s32 %s12, 1
      %s20 = ssub.s32 %s12, %s19
      %p21 = scmp.eq.s32.totalorder %s20, 0
      %s23 = sadd.s32 %s22, 1
      %s24 = scalar_select %p21, %s22, %s23
      %p27 = pneg %p21
      %p28 = scmp.eq.s32.totalorder %s12, 3
      %p29 = por %p27, %p28
      %p30 = scmp.ne.s32.totalorder %s22, %s25
      %p31 = scmp.eq.s32.totalorder %s12, 0
      %p32 = por %p30, %p31
      %p33 = scmp.ne.s32.totalorder %s22, %s25
      %p34 = scmp.eq.s32.totalorder %s17, 3
      %p35 = por %p33, %p34
      %p36 = scmp.ne.s32.totalorder %s25, %s26
      %p37 = scmp.eq.s32.totalorder %s17, 0
      %p38 = por %p36, %p37
      %p39 = scmp.ne.s32.totalorder %s25, %s26
      %p40 = scmp.eq.s32.totalorder %s18, 3
      %p41 = por %p39, %p40
      %p43 = scmp.ne.s32.totalorder %s26, %s42
      %p44 = scmp.eq.s32.totalorder %s18, 0
      %p45 = por %p43, %p44
      %s47 = sadd.s32 %s46, 1
      %p50 = scmp.eq.s32.totalorder %s12, 3
      %p51 = scmp.ne.s32.totalorder %s46, %s48
      %p52 = scmp.eq.s32.totalorder %s12, 0
      %p53 = por %p51, %p52
      %p54 = scmp.ne.s32.totalorder %s46, %s48
      %p55 = scmp.eq.s32.totalorder %s17, 3
      %p56 = por %p54, %p55
      %p57 = scmp.ne.s32.totalorder %s48, %s49
      %p58 = scmp.eq.s32.totalorder %s17, 0
      %p59 = por %p57, %p58
      %p60 = scmp.ne.s32.totalorder %s48, %s49
      %p61 = scmp.eq.s32.totalorder %s18, 3
      %p62 = por %p60, %p61
      %p64 = scmp.ne.s32.totalorder %s49, %s63
      %p65 = scmp.eq.s32.totalorder %s18, 0
      %p66 = por %p64, %p65
      %s68 = sadd.s32 %s67, 1
      %p71 = scmp.eq.s32.totalorder %s12, 3
      %p72 = scmp.ne.s32.totalorder %s67, %s69
      %p73 = scmp.eq.s32.totalorder %s12, 0
      %p74 = por %p72, %p73
      %p75 = scmp.ne.s32.totalorder %s67, %s69
      %p76 = scmp.eq.s32.totalorder %s17, 3
      %p77 = por %p75, %p76
      %p78 = scmp.ne.s32.totalorder %s69, %s70
      %p79 = scmp.eq.s32.totalorder %s17, 0
      %p80 = por %p78, %p79
      %p81 = scmp.ne.s32.totalorder %s69, %s70
      %p82 = scmp.eq.s32.totalorder %s18, 3
      %p83 = por %p81, %p82
      %p85 = scmp.ne.s32.totalorder %s70, %s84
      %p86 = scmp.eq.s32.totalorder %s18, 0
      %p87 = por %p85, %p86
      %s88 = ssub.s32 %s12, %s19
      %p89 = scmp.eq.s32.totalorder %s88, 0
      %s91 = sadd.s32 %s90, 1
      %s92 = scalar_select %p89, %s90, %s91
      %p95 = pneg %p89
      %p96 = scmp.eq.s32.totalorder %s12, 3
      %p97 = por %p95, %p96
      %p98 = scmp.ne.s32.totalorder %s90, %s93
      %p99 = scmp.eq.s32.totalorder %s12, 0
      %p100 = por %p98, %p99
      %p101 = scmp.ne.s32.totalorder %s90, %s93
      %p102 = scmp.eq.s32.totalorder %s17, 3
      %p103 = por %p101, %p102
      %p104 = scmp.ne.s32.totalorder %s93, %s94
      %p105 = scmp.eq.s32.totalorder %s17, 0
      %p106 = por %p104, %p105
      %p107 = scmp.ne.s32.totalorder %s93, %s94
      %p108 = scmp.eq.s32.totalorder %s18, 3
      %p109 = por %p107, %p108
      %p111 = scmp.ne.s32.totalorder %s94, %s110
      %p112 = scmp.eq.s32.totalorder %s18, 0
      %p113 = por %p111, %p112
      %p114 = scmp.le.s32.totalorder 1, %s12
      %p115 = scmp.lt.s32.totalorder %s12, 5
      %p116 = pnand %p114, %p115
      %p117 = pneg %p116
      // Predicated region
      $region9: #{tpu_custom_call.1} parent=5 // pred_check
        _
      $region10: #{tpu_custom_call.1} parent=5 // pred_check_branch
        %119 = sbr.rel (%p116) target = $region12
      $region11: #{tpu_custom_call.1} parent=5 // pred_region
        %s120 = ssub.s32 %s12, 1
        // Predicated region
        $region13: #{tpu_custom_call.1} parent=11 // pred_check
          %p121 = pneg %p59
        $region14: #{tpu_custom_call.1} parent=11 // pred_check_branch
          %123 = sbr.rel (%p121) target = $region16
        $region15: #{tpu_custom_call.1} parent=11 // pred_region
          _
        $region16: #{tpu_custom_call.1} parent=11 // pred_fallthru
          _
        // Predicated region
        $region17: #{tpu_custom_call.1} parent=11 // pred_check
          %p124 = pneg %p80
        $region18: #{tpu_custom_call.1} parent=11 // pred_check_branch
          %126 = sbr.rel (%p124) target = $region20
        $region19: #{tpu_custom_call.1} parent=11 // pred_region
          _
        $region20: #{tpu_custom_call.1} parent=11 // pred_fallthru
          _
      $region12: #{tpu_custom_call.1} parent=5 // pred_fallthru
        _
      %p127 = scmp.lt.s32.totalorder %s12, 4
      // Predicated region
      $region21: #{tpu_custom_call.1} parent=5 // pred_check
        %p128 = pneg %p127
      $region22: #{tpu_custom_call.1} parent=5 // pred_check_branch
        %130 = sbr.rel (%p128) target = $region24
      $region23: #{tpu_custom_call.1} parent=5 // pred_region
        // Predicated region
        $region25: #{tpu_custom_call.1} parent=23 // pred_check
          %p131 = pneg %p32
        $region26: #{tpu_custom_call.1} parent=23 // pred_check_branch
          %133 = sbr.rel (%p131) target = $region28
        $region27: #{tpu_custom_call.1} parent=23 // pred_region
          %s134 = smul.u32 16, %s12
          %p135 = scmp.lt.s32.totalorder %s134, 63
          %s136 = scalar_select %p135, %s134, 63
          %s137 = smul.addr %s136, 8
          %s138 = scalar_lea.vmem %s0, %s137
          %s139 = smul.u32 16, %s12
        $region28: #{tpu_custom_call.1} parent=23 // pred_fallthru
          _
      $region24: #{tpu_custom_call.1} parent=5 // pred_fallthru
        _
      %p140 = scmp.le.s32.totalorder 1, %s12
      %p141 = scmp.lt.s32.totalorder %s12, 5
      %p142 = pnand %p140, %p141
      %p143 = pneg %p142
      // Predicated region
      $region29: #{tpu_custom_call.1} parent=5 // pred_check
        _
      $region30: #{tpu_custom_call.1} parent=5 // pred_check_branch
        %145 = sbr.rel (%p142) target = $region32
      $region31: #{tpu_custom_call.1} parent=5 // pred_region
        %s146 = ssub.s32 %s12, 1
        %s147 = smul.u32 16, %s17
        %p148 = scmp.lt.s32.totalorder %s147, 63
        %s149 = scalar_select %p148, %s147, 63
        %s150 = smul.addr %s149, 8
        %s151 = scalar_lea.vmem %s0, %s150
        %p152 = pneg %p38
        %p153 = pneg %p35
        %p154 = pneg %p59
        %p155 = pneg %p56
        %p156 = pneg %p80
        %p157 = pneg %p77
        %p158 = pneg %p106
        %p159 = pneg %p103
        %s160 = sand.u32 %s93, 1
        %s161 = scalar_lea.sflag [#allocation3], %s160
        %s162 = sand.u32 %s93, 1
        %s163 = smul.addr %s162, 16
        %s164 = scalar_lea.vmem [#allocation2], %s163
        %s165 = smul.u32 16, %s17
        %p166 = scmp.lt.s32.totalorder %s165, 63
        %s167 = scalar_select %p166, %s165, 63
        %s168 = smul.addr %s167, 8
        %s169 = scalar_lea.vmem %s0, %s168
        %s170 = smul.u32 16, %s17
        %v171 = vld [vmem:[%s169] sm:$0xff]
        %v172 = vld [vmem:[%s169 + $0x8] sm:$0xff]
        %v173 = vld [vmem:[%s169 + $0x10] sm:$0xff]
        %v174 = vld [vmem:[%s169 + $0x18] sm:$0xff]
        %v175 = vld [vmem:[%s169 + $0x20] sm:$0xff]
        %v176 = vld [vmem:[%s169 + $0x28] sm:$0xff]
        %v177 = vld [vmem:[%s169 + $0x30] sm:$0xff]
        %v178 = vld [vmem:[%s169 + $0x38] sm:$0xff]
        %v179 = vld [vmem:[%s169 + $0x40] sm:$0xff]
        %v180 = vld [vmem:[%s169 + $0x48] sm:$0xff]
        %v181 = vld [vmem:[%s169 + $0x50] sm:$0xff]
        %v182 = vld [vmem:[%s169 + $0x58] sm:$0xff]
        %v183 = vld [vmem:[%s169 + $0x60] sm:$0xff]
        %v184 = vld [vmem:[%s169 + $0x68] sm:$0xff]
        %v185 = vld [vmem:[%s169 + $0x70] sm:$0xff]
        %v186 = vld [vmem:[%s169 + $0x78] sm:$0xff]
        %v187 = vld [vmem:[%s1] sm:$0xff]
        %v188 = vld [vmem:[%s1 + $0x8] sm:$0xff]
        %v189 = vld [vmem:[%s2] sm:$0xff]
        %v190 = vld [vmem:[%s2 + $0x8] sm:$0xff]
        %192 = vset.pattern.permute.xlu0 0
        %193 = vperm.xlu0 %192, %v189
        %v194 = vpop.permute.xlu0 %193
        %197 = vset.pattern.permute.xlu0 0
        %198 = vperm.xlu0 %197, %v190
        %v199 = vpop.permute.xlu0 %198
        %vm201 = vcmask 261120
        %v203 = vsel %vm201, %v187, 0
        %v206 = vsel %vm201, %v188, 0
        %v209 = vsel %vm201, %v171, 0
        %v212 = vsel %vm201, %v172, 0
        %v215 = vsel %vm201, %v173, 0
        %v218 = vsel %vm201, %v174, 0
        %v221 = vsel %vm201, %v175, 0
        %v224 = vsel %vm201, %v176, 0
        %v227 = vsel %vm201, %v177, 0
        %v230 = vsel %vm201, %v178, 0
        %v233 = vsel %vm201, %v179, 0
        %v236 = vsel %vm201, %v180, 0
        %v239 = vsel %vm201, %v181, 0
        %v242 = vsel %vm201, %v182, 0
        %v245 = vsel %vm201, %v183, 0
        %v248 = vsel %vm201, %v184, 0
        %v251 = vsel %vm201, %v185, 0
        %v254 = vsel %vm201, %v186, 0
        %256 = vmatprep.subr.mxu0 0.0
        %257 = vmatpush1.xpose.msra.mxu0 %v209
        %258 = vmatprep.subr.mxu0 0.0
        %259 = vmatpush1.xpose.msra.mxu0 %v212
        %260 = vmatprep.subr.mxu0 0.0
        %261 = vmatpush1.xpose.msra.mxu0 %v215
        %262 = vmatprep.subr.mxu0 0.0
        %263 = vmatpush1.xpose.msra.mxu0 %v218
        %264 = vmatprep.subr.mxu0 0.0
        %265 = vmatpush1.xpose.msra.mxu0 %v221
        %266 = vmatprep.subr.mxu0 0.0
        %267 = vmatpush1.xpose.msra.mxu0 %v224
        %268 = vmatprep.subr.mxu0 0.0
        %269 = vmatpush1.xpose.msra.mxu0 %v227
        %270 = vmatprep.subr.mxu0 0.0
        %271 = vmatpush1.xpose.msra.mxu0 %v230
        %272 = vmatprep.subr.mxu0 0.0
        %273 = vmatpush1.xpose.msra.mxu0 %v233
        %274 = vmatprep.subr.mxu0 0.0
        %275 = vmatpush1.xpose.msra.mxu0 %v236
        %276 = vmatprep.subr.mxu0 0.0
        %277 = vmatpush1.xpose.msra.mxu0 %v239
        %278 = vmatprep.subr.mxu0 0.0
        %279 = vmatpush1.xpose.msra.mxu0 %v242
        %280 = vmatprep.subr.mxu0 0.0
        %281 = vmatpush1.xpose.msra.mxu0 %v245
        %282 = vmatprep.subr.mxu0 0.0
        %283 = vmatpush1.xpose.msra.mxu0 %v248
        %284 = vmatprep.subr.mxu0 0.0
        %285 = vmatpush1.xpose.msra.mxu0 %v251
        %286 = vmatprep.subr.mxu0 0.0
        %287 = vmatpush1.xpose.msra.mxu0 %v254
        %288 = vmatprep.subr.mxu0 0.0
        %289 = vmatpush1.xpose.msra.mxu0 0.0
        %290 = vmatprep.subr.mxu0 0.0
        %291 = vmatpush1.xpose.msra.mxu0 0.0
        %292 = vmatprep.subr.mxu0 0.0
        %293 = vmatpush1.xpose.msra.mxu0 0.0
        %294 = vmatprep.subr.mxu0 0.0
        %295 = vmatpush1.xpose.msra.mxu0 0.0
        %296 = vmatprep.subr.mxu0 0.0
        %297 = vmatpush1.xpose.msra.mxu0 0.0
        %298 = vmatprep.subr.mxu0 0.0
        %299 = vmatpush1.xpose.msra.mxu0 0.0
        %300 = vmatprep.subr.mxu0 0.0
        %301 = vmatpush1.xpose.msra.mxu0 0.0
        %302 = vmatprep.subr.mxu0 0.0
        %303 = vmatpush1.xpose.msra.mxu0 0.0
        %304 = vmatprep.subr.mxu0 0.0
        %305 = vmatpush1.xpose.msra.mxu0 0.0
        %306 = vmatprep.subr.mxu0 0.0
        %307 = vmatpush1.xpose.msra.mxu0 0.0
        %308 = vmatprep.subr.mxu0 0.0
        %309 = vmatpush1.xpose.msra.mxu0 0.0
        %310 = vmatprep.subr.mxu0 0.0
        %311 = vmatpush1.xpose.msra.mxu0 0.0
        %312 = vmatprep.subr.mxu0 0.0
        %313 = vmatpush1.xpose.msra.mxu0 0.0
        %314 = vmatprep.subr.mxu0 0.0
        %315 = vmatpush1.xpose.msra.mxu0 0.0
        %316 = vmatprep.subr.mxu0 0.0
        %317 = vmatpush1.xpose.msra.mxu0 0.0
        %318 = vmatprep.subr.mxu0 0.0
        %319 = vmatpush1.xpose.msra.mxu0 0.0
        %320 = vmatprep.mubr.f32.mxu0 0.0
        %321 = vmatmul.mubr.f32.gmra.mrb[0].mxu0 %v203
        %v322 = vpop.f32.mrb[0].mxu0
        %v323 = vadd.f32 %v194, %v322
        %v324 = vpop.f32.mrb[0].mxu0
        %325 = vmatprep.mubr.f32.mxu0 0.0
        %326 = vmatmul.mubr.f32.gmra.mrb[0].mxu0 %v206
        %v327 = vpop.f32.mrb[0].mxu0
        %v328 = vadd.f32 %v199, %v327
        %v329 = vpop.f32.mrb[0].mxu0
        %330 = vdwg.mxu0
        %v331 = vxor.u32 %v323, 2147483648
        %v332 = vxor.u32 %v328, 2147483648
        %v333 = vmul.f32 %v331, 1.442695
        %v334 = vpow.pop %v333
        %v335 = vmul.f32 %v332, 1.442695
        %v336 = vpow.pop %v335
        %v337 = vadd.f32 %v334, 1.0
        %v338 = vadd.f32 %v336, 1.0
        %v339 = vrcp.pop %v337
        %v340 = vmul.f32 1.0, %v339
        %v341 = vrcp.pop %v338
        %v342 = vmul.f32 1.0, %v341
        %343 = vst [vmem:[%s164] sm:$0xff] %v340
        %344 = vst [vmem:[%s164 + $0x8] sm:$0xff] %v342
        %s345 = sand.u32 %s93, 1
        %s346 = scalar_lea.sflag [#allocation3], %s345
        %s347 = sand.u32 %s93, 1
        %s348 = smul.addr %s347, 16
        %s349 = scalar_lea.vmem [#allocation2], %s348
        // Predicated region
        $region33: #{tpu_custom_call.1} parent=31 // pred_check
          %p350 = pneg %p103
        $region34: #{tpu_custom_call.1} parent=31 // pred_check_branch
          %352 = sbr.rel (%p350) target = $region36
        $region35: #{tpu_custom_call.1} parent=31 // pred_region
          %s354 = ssub.s32 256, 256
          %355 = vsyncadd %s346, %s354
          %s356 = smul.addr %s17, 128
          %s357 = scalar_lea.hbm %s3, %s356
          %s358 = sshll.u32 %s349, 4
          %s359 = int_to_ptr.vmem [resolvable:$true] %s358
          %364 = dma.vmem_to_hbm [thread:$0]  %s359, 256, %s357, %s346, 128, 512, 8
        $region36: #{tpu_custom_call.1} parent=31 // pred_fallthru
          _
      $region32: #{tpu_custom_call.1} parent=5 // pred_fallthru
        _
      %p365 = scmp.le.s32.totalorder 2, %s12
      // Predicated region
      $region37: #{tpu_custom_call.1} parent=5 // pred_check
        %p366 = pneg %p365
      $region38: #{tpu_custom_call.1} parent=5 // pred_check_branch
        %368 = sbr.rel (%p366) target = $region40
      $region39: #{tpu_custom_call.1} parent=5 // pred_region
        %s369 = ssub.s32 %s12, 2
        // Predicated region
        $region41: #{tpu_custom_call.1} parent=39 // pred_check
          %p370 = pneg %p109
        $region42: #{tpu_custom_call.1} parent=39 // pred_check_branch
          %372 = sbr.rel (%p370) target = $region44
        $region43: #{tpu_custom_call.1} parent=39 // pred_region
          %s373 = sand.u32 %s94, 1
          %s374 = scalar_lea.sflag [#allocation3], %s373
          %s375 = sand.u32 %s94, 1
          %s376 = smul.addr %s375, 16
          %s377 = scalar_lea.vmem [#allocation2], %s376
          %378 = dma.done %s374, 256
        $region44: #{tpu_custom_call.1} parent=39 // pred_fallthru
          _
      $region40: #{tpu_custom_call.1} parent=5 // pred_fallthru
        _
    $region6: #{tpu_custom_call.1} parent=1 // loop_footer
      %s16 = sadd.s32 1, %s12
    $region7: #{tpu_custom_call.1} parent=1 // loop_footer_branch
      %11 = sbr.rel target = $region3
    $region8: #{tpu_custom_call.1} parent=1 // loop_exit
      _
    %379 = vsyncpa [#allocation3], 1
    %s380 = scalar_lea.sflag [#allocation3], 1
    %381 = vsyncpa %s380, 1

</llo_original>
